<compile_context>
chip_gen: v6e
topology: v6e:2x2x1
jax: 0.10.0
libtpu: 0.0.40
codegen_flags: <defaults>
</compile_context>

<pallas_src>
import functools

import jax
import jax.numpy as jnp
from jax import lax
from jax.experimental import pallas as pl
from jax.experimental.pallas import tpu as pltpu

# ITU-R 601-2 luma weights used by torchvision rgb_to_grayscale
_GRAY_W = (0.2989, 0.587, 0.114)

_LANE = 128
_MAX_TILE_HW = 64 * 1024  # 64K elems/channel -> (1,3,T) f32 block ~= 768 KiB


def _choose_tile_hw(hw, max_tile=_MAX_TILE_HW):
    """Largest tile that divides hw, is a multiple of 128 and <= max_tile."""
    if hw <= max_tile:
        return hw  # whole image in one block (full-dim block is always legal)
    start = max_tile - (max_tile % _LANE)
    for cand in range(start, _LANE - 1, -_LANE):
        if hw % cand == 0:
            return cand
    return hw  # fallback: single full-extent block (correct, just larger VMEM)


def _gray_mean_kernel(x_ref, mean_ref, acc_ref, *, inv_hw):
    # x_ref:    VMEM (1, 3, TILE)   input tile (lane-dense)
    # mean_ref: VMEM (1, 8, 128)    per-image mean, broadcast into one vreg tile
    # acc_ref:  SMEM (1,) f32       running gray sum for the current image
    t = pl.program_id(1)

    @pl.when(t == 0)
    def _():
        acc_ref[0] = jnp.float32(0.0)

    x = x_ref[...].astype(jnp.float32)              # (1, 3, TILE)
    gray = (_GRAY_W[0] * x[:, 0, :]
            + _GRAY_W[1] * x[:, 1, :]
            + _GRAY_W[2] * x[:, 2, :])              # (1, TILE)
    acc_ref[0] += jnp.sum(gray)

    @pl.when(t == pl.num_programs(1) - 1)
    def _():
        mean_ref[...] = jnp.full(mean_ref.shape, acc_ref[0] * inv_hw, jnp.float32)


def _blend_kernel(factor_ref, means_ref, x_ref, o_ref):
    # factor_ref: SMEM (1,) f32     contrast factor
    # means_ref:  SMEM (N,) f32     per-image gray means
    # x_ref/o_ref: VMEM (1, 3, TILE)
    n = pl.program_id(0)
    factor = factor_ref[0]
    add = (1.0 - factor) * means_ref[n]             # scalar, hoisted out of the blend

    # Keep bf16 tensors in bf16 (native VPU on v6e/v7x); everything else in f32.
    cdt = jnp.bfloat16 if x_ref.dtype == jnp.bfloat16 else jnp.float32
    x = x_ref[...].astype(cdt)
    out = factor.astype(cdt) * x + add.astype(cdt)  # one FMA-equivalent per element
    o_ref[...] = jnp.clip(out, 0.0, 1.0).astype(o_ref.dtype)


def adjust_contrast_pallas(img, factor):
    """img: (N, 3, H, W) float; factor: scalar (traced or python float)."""
    N, C, H, W = img.shape
    assert C == 3, "Contrast kernel assumes RGB (C == 3)"
    HW = H * W
    x = img.reshape(N, C, HW)                       # lane-dense layout plumbing
    tile = _choose_tile_hw(HW)
    num_tiles = HW // tile

    # Pass 1: per-image gray mean (tiled reduction over H*W).
    means_pad = pl.pallas_call(
        functools.partial(_gray_mean_kernel, inv_hw=1.0 / float(HW)),
        out_shape=jax.ShapeDtypeStruct((N, 8, 128), jnp.float32),
        grid=(N, num_tiles),
        in_specs=[pl.BlockSpec((1, C, tile), lambda n, t: (n, 0, t))],
        out_specs=pl.BlockSpec((1, 8, 128), lambda n, t: (n, 0, 0)),
        scratch_shapes=[pltpu.SMEM((1,), jnp.float32)],
        compiler_params=pltpu.CompilerParams(
            dimension_semantics=("parallel", "arbitrary")),
    )(x)
    means = means_pad[:, 0, 0]                      # (N,) f32, tiny

    factor_arr = jnp.reshape(jnp.asarray(factor, jnp.float32), (1,))

    # Pass 2: elementwise blend + clamp, fully parallel grid.
    out = pl.pallas_call(
        _blend_kernel,
        out_shape=jax.ShapeDtypeStruct((N, C, HW), img.dtype),
        grid=(N, num_tiles),
        in_specs=[
            pl.BlockSpec(memory_space=pltpu.MemorySpace.SMEM),   # factor
            pl.BlockSpec(memory_space=pltpu.MemorySpace.SMEM),   # per-image means
            pl.BlockSpec((1, C, tile), lambda n, t: (n, 0, t)),  # image tile
        ],
        out_specs=pl.BlockSpec((1, C, tile), lambda n, t: (n, 0, t)),
        compiler_params=pltpu.CompilerParams(
            dimension_semantics=("parallel", "parallel")),
    )(factor_arr, means, x)
    return out.reshape(N, C, H, W)


def contrast_forward(key, img, label=None, bound=0.4, p=0.5):
    """JAX equivalent of Contrast(bound, p).forward(img, label).

    Randomness (factor sampling + apply coin-flip) is deterministic via `key`.
    The coin-flip is a lax.cond so the "not applied" branch does no HBM work
    and returns img bit-exactly (no clamp).
    """
    k_factor, k_coin = jax.random.split(key)
    factor = jax.random.uniform(
        k_factor, (), minval=1.0 - bound, maxval=1.0 + bound)
    apply = jax.random.uniform(k_coin, ()) < p

    out = lax.cond(
        apply,
        lambda im: adjust_contrast_pallas(im, factor),
        lambda im: im,
        img)
    return out, label


if __name__ == "__main__":
    key = jax.random.PRNGKey(0)
    k_img, k_fwd = jax.random.split(key)

    # Small NCHW RGB batch, values in [0, 1] like a normalized image.
    img = jax.random.uniform(k_img, (2, 3, 16, 16), dtype=jnp.float32)

    # Deterministic correctness check of the contrast kernel itself.
    factor_test = jnp.float32(1.3)
    got = jax.block_until_ready(adjust_contrast_pallas(img, factor_test))
    gray = (_GRAY_W[0] * img[:, 0] + _GRAY_W[1] * img[:, 1]
            + _GRAY_W[2] * img[:, 2])
    mean = gray.mean(axis=(1, 2)).reshape(-1, 1, 1, 1)
    ref = jnp.clip(factor_test * img + (1.0 - factor_test) * mean, 0.0, 1.0)
    assert got.shape == img.shape and got.dtype == img.dtype
    assert bool(jnp.allclose(got, ref, atol=2e-5, rtol=2e-5))

    # Full forward (random factor + coin-flip).
    out, label = contrast_forward(k_fwd, img, label=None, bound=0.4, p=0.5)
    out = jax.block_until_ready(out)
    assert out.shape == img.shape and out.dtype == img.dtype

    print("KERNEL_OK")
</pallas_src>

<mosaic_0001>
module attributes {stable_mosaic.version = 11 : i64} {
  func.func @_gray_mean_kernel(%arg0: i32, %arg1: i32, %arg2: memref<1x3x256xf32, #tpu.memory_space<vmem>>, %arg3: memref<1x8x128xf32, #tpu.memory_space<vmem>>, %arg4: memref<1xf32, #tpu.memory_space<smem>>) attributes {dimension_semantics = [#tpu.dimension_semantics<parallel>, #tpu.dimension_semantics<arbitrary>], iteration_bounds = array<i64: 2, 1>, scalar_prefetch = 0 : i64, scratch_operands = 1 : i64, tpu.core_type = #tpu.core_type<tc>, window_params = [{transform_indices = @transform_0, window_bounds = array<i64: 1, 3, 256>}, {transform_indices = @transform_1, window_bounds = array<i64: 1, 8, 128>}]} {
    %c0_i32 = arith.constant 0 : i32
    %0 = arith.cmpi eq, %arg1, %c0_i32 : i32
    %1 = arith.extui %0 : i1 to i32
    %c0_i32_0 = arith.constant 0 : i32
    %2 = arith.cmpi ne, %1, %c0_i32_0 : i32
    scf.if %2 {
      %cst_10 = arith.constant 0.000000e+00 : f32
      %c0_11 = arith.constant 0 : index
      %28 = memref.load %arg4[%c0_11] : memref<1xf32, #tpu.memory_space<smem>>
      memref.store %cst_10, %arg4[%c0_11] : memref<1xf32, #tpu.memory_space<smem>>
    } else {
    }
    %c0 = arith.constant 0 : index
    %c0_1 = arith.constant 0 : index
    %c0_2 = arith.constant 0 : index
    %3 = vector.load %arg2[%c0, %c0_1, %c0_2] : memref<1x3x256xf32, #tpu.memory_space<vmem>>, vector<1x3x256xf32>
    %4 = vector.extract_strided_slice %3 {offsets = [0, 0, 0], sizes = [1, 1, 256], strides = [1, 1, 1]} : vector<1x3x256xf32> to vector<1x1x256xf32>
    %5 = vector.shape_cast %4 : vector<1x1x256xf32> to vector<1x256xf32>
    %cst = arith.constant 2.989000e-01 : f32
    %6 = vector.broadcast %cst : f32 to vector<1x256xf32>
    %7 = arith.mulf %6, %5 : vector<1x256xf32>
    %8 = vector.extract_strided_slice %3 {offsets = [0, 1, 0], sizes = [1, 1, 256], strides = [1, 1, 1]} : vector<1x3x256xf32> to vector<1x1x256xf32>
    %9 = vector.shape_cast %8 : vector<1x1x256xf32> to vector<1x256xf32>
    %cst_3 = arith.constant 5.870000e-01 : f32
    %10 = vector.broadcast %cst_3 : f32 to vector<1x256xf32>
    %11 = arith.mulf %10, %9 : vector<1x256xf32>
    %12 = arith.addf %7, %11 : vector<1x256xf32>
    %13 = vector.extract_strided_slice %3 {offsets = [0, 2, 0], sizes = [1, 1, 256], strides = [1, 1, 1]} : vector<1x3x256xf32> to vector<1x1x256xf32>
    %14 = vector.shape_cast %13 : vector<1x1x256xf32> to vector<1x256xf32>
    %cst_4 = arith.constant 1.140000e-01 : f32
    %15 = vector.broadcast %cst_4 : f32 to vector<1x256xf32>
    %16 = arith.mulf %15, %14 : vector<1x256xf32>
    %17 = arith.addf %12, %16 : vector<1x256xf32>
    %c0_5 = arith.constant 0 : index
    %18 = memref.load %arg4[%c0_5] : memref<1xf32, #tpu.memory_space<smem>>
    %19 = vector.shape_cast %17 : vector<1x256xf32> to vector<1x1x256xf32>
    %cst_6 = arith.constant dense<0.000000e+00> : vector<1xf32>
    %20 = vector.multi_reduction <add>, %19, %cst_6 [1, 2] : vector<1x1x256xf32> to vector<1xf32>
    %21 = vector.shape_cast %20 : vector<1xf32> to vector<1x1x1xf32>
    %22 = vector.extract %21[0, 0, 0] : f32 from vector<1x1x1xf32>
    %23 = arith.addf %18, %22 : f32
    %c0_7 = arith.constant 0 : index
    %24 = memref.load %arg4[%c0_7] : memref<1xf32, #tpu.memory_space<smem>>
    memref.store %23, %arg4[%c0_7] : memref<1xf32, #tpu.memory_space<smem>>
    %c0_i32_8 = arith.constant 0 : i32
    %25 = arith.cmpi eq, %arg1, %c0_i32_8 : i32
    %26 = arith.extui %25 : i1 to i32
    %c0_i32_9 = arith.constant 0 : i32
    %27 = arith.cmpi ne, %26, %c0_i32_9 : i32
    scf.if %27 {
      %c0_10 = arith.constant 0 : index
      %28 = memref.load %arg4[%c0_10] : memref<1xf32, #tpu.memory_space<smem>>
      %cst_11 = arith.constant 3.906250e-03 : f32
      %29 = arith.mulf %28, %cst_11 : f32
      %30 = vector.broadcast %29 : f32 to vector<1x8x128xf32>
      %c0_12 = arith.constant 0 : index
      %c0_13 = arith.constant 0 : index
      %c0_14 = arith.constant 0 : index
      %31 = vector.load %arg3[%c0_12, %c0_13, %c0_14] : memref<1x8x128xf32, #tpu.memory_space<vmem>>, vector<1x8x128xf32>
      tpu.vector_store %arg3[%c0_12, %c0_13, %c0_14], %30 {strides = array<i32>} : memref<1x8x128xf32, #tpu.memory_space<vmem>>, vector<1x8x128xf32>,
    } else {
    }
    return
  }
  func.func @transform_0(%arg0: i32, %arg1: i32) -> (i32, i32, i32) {
    %c0_i32 = arith.constant 0 : i32
    %c0_i32_0 = arith.constant 0 : i32
    return %arg0, %c0_i32, %arg1 : i32, i32, i32
  }
  func.func @transform_1(%arg0: i32, %arg1: i32) -> (i32, i32, i32) {
    %c0_i32 = arith.constant 0 : i32
    %c0_i32_0 = arith.constant 0 : i32
    %c0_i32_1 = arith.constant 0 : i32
    return %arg0, %c0_i32, %c0_i32_0 : i32, i32, i32
  }
}

</mosaic_0001>

<llo_original>
// kernel: tpu_custom_call.1
$region0: #{tpu_custom_call.1}
  #allocation0 [shape = 'u32[]', space=smem, size = 0x4, offset = 0x4, fixed_abs, tag = 'smem constant byte address 0x4 - core index']
  #allocation1 [shape = 'u32[144,128]{1,0:T(1,128)}', space=vmem, size = 0x12000, scoped, tag = 'internal scratch']
  #allocation2 [shape = 'f32[1]{0:T(128)}', space=smem, size = 0x200, scoped, tag = 'scratch operand']
  %s0 = inlined_call_operand.vmem [shape: f32[2,3,256], index: 0, kind: input, shape index: {}]
  %s1 = inlined_call_operand.hbm [shape: f32[2,8,128], index: 1, kind: output, shape index: {}]
  %s2 = sld [smem:[#allocation0]]
  $region45: #{tpu_custom_call.1} parent=0
    _
  %s4 = ssub.s32 1, %s2
  %s5 = scalar_select 0, %s4, %s2
  $region1: #{tpu_custom_call.1} parent=0
    #allocation3 [shape = 'u8[8192]{0}', space=vmem, size = 0x2000, scoped, tag = 'output window, operand 0']
    #allocation4 [shape = 's32[2]{0}', space=sflag, size = 0x8, scoped, tag = 'scoped memory for tpu_custom_call.1']
    %6 = vsyncpa [#allocation4], 0
    %s7 = scalar_lea.sflag [#allocation4], 1
    %8 = vsyncpa %s7, 0
    loop: start=0, step=1, limit=4
    $region2: #{tpu_custom_call.1} parent=1 // loop_pre_header
      _
    $region3: #{tpu_custom_call.1} parent=1 // loop_header
      %s10 = sphi 0, %s14
      %p11 = scmp.ge.s32.totalorder %s10, 4
      %s17 = sphi 0, %s29
      %s18 = sphi 0, %s25
      %s19 = sphi 0, %s17
      %s20 = sphi 0, %s18
      %s21 = sphi 0, %s19
      %s22 = sphi 0, %s20
      %s34 = sphi 0, %s36
      %s37 = sphi 0, %s34
      %s38 = sphi 0, %s37
      %s54 = sphi 0, %s38
      %s60 = sphi 0, %s62
      %s63 = sphi 0, %s60
      %s64 = sphi 0, %s63
      %s80 = sphi 0, %s64
    $region4: #{tpu_custom_call.1} parent=1 // loop_header_branch
      %13 = sbr.rel (%p11) target = $region8
    $region5: #{tpu_custom_call.1} parent=1 // loop_body
      %s15 = ssub.s32 %s10, 1
      %s16 = ssub.s32 %s10, 2
      %s23 = sadd.s32 1, %s18
      %p24 = scmp.ge.s32.totalorder %s23, 1
      %s25 = scalar_select %p24, 0, %s23
      %s26 = sadd.s32 1, %s17
      %s27 = scalar_select %p24, %s26, %s17
      %p28 = scmp.ge.s32.totalorder %s27, 2
      %s29 = scalar_select %p28, 0, %s27
      %s30 = ssub.s32 %s17, %s29
      %s31 = ssub.s32 %s18, %s25
      %s32 = sor.u32 %s30, %s31
      %p33 = scmp.eq.s32.totalorder %s32, 0
      %s35 = sadd.s32 %s34, 1
      %s36 = scalar_select %p33, %s34, %s35
      %p39 = pneg %p33
      %p40 = scmp.eq.s32.totalorder %s10, 1
      %p41 = por %p39, %p40
      %p42 = scmp.ne.s32.totalorder %s34, %s37
      %p43 = scmp.eq.s32.totalorder %s10, 0
      %p44 = por %p42, %p43
      %p45 = scmp.ne.s32.totalorder %s34, %s37
      %p46 = scmp.eq.s32.totalorder %s15, 1
      %p47 = por %p45, %p46
      %p48 = scmp.ne.s32.totalorder %s37, %s38
      %p49 = scmp.eq.s32.totalorder %s15, 0
      %p50 = por %p48, %p49
      %p51 = scmp.ne.s32.totalorder %s37, %s38
      %p52 = scmp.eq.s32.totalorder %s16, 1
      %p53 = por %p51, %p52
      %p55 = scmp.ne.s32.totalorder %s38, %s54
      %p56 = scmp.eq.s32.totalorder %s16, 0
      %p57 = por %p55, %p56
      %s58 = ssub.s32 %s17, %s29
      %p59 = scmp.eq.s32.totalorder %s58, 0
      %s61 = sadd.s32 %s60, 1
      %s62 = scalar_select %p59, %s60, %s61
      %p65 = pneg %p59
      %p66 = scmp.eq.s32.totalorder %s10, 1
      %p67 = por %p65, %p66
      %p68 = scmp.ne.s32.totalorder %s60, %s63
      %p69 = scmp.eq.s32.totalorder %s10, 0
      %p70 = por %p68, %p69
      %p71 = scmp.ne.s32.totalorder %s60, %s63
      %p72 = scmp.eq.s32.totalorder %s15, 1
      %p73 = por %p71, %p72
      %p74 = scmp.ne.s32.totalorder %s63, %s64
      %p75 = scmp.eq.s32.totalorder %s15, 0
      %p76 = por %p74, %p75
      %p77 = scmp.ne.s32.totalorder %s63, %s64
      %p78 = scmp.eq.s32.totalorder %s16, 1
      %p79 = por %p77, %p78
      %p81 = scmp.ne.s32.totalorder %s64, %s80
      %p82 = scmp.eq.s32.totalorder %s16, 0
      %p83 = por %p81, %p82
      %p84 = scmp.le.s32.totalorder 1, %s10
      %p85 = scmp.lt.s32.totalorder %s10, 3
      %p86 = pnand %p84, %p85
      %p87 = pneg %p86
      // Predicated region
      $region9: #{tpu_custom_call.1} parent=5 // pred_check
        _
      $region10: #{tpu_custom_call.1} parent=5 // pred_check_branch
        %89 = sbr.rel (%p86) target = $region12
      $region11: #{tpu_custom_call.1} parent=5 // pred_region
        %s90 = ssub.s32 %s10, 1
      $region12: #{tpu_custom_call.1} parent=5 // pred_fallthru
        _
      %p91 = scmp.lt.s32.totalorder %s10, 2
      // Predicated region
      $region13: #{tpu_custom_call.1} parent=5 // pred_check
        %p92 = pneg %p91
      $region14: #{tpu_custom_call.1} parent=5 // pred_check_branch
        %94 = sbr.rel (%p92) target = $region16
      $region15: #{tpu_custom_call.1} parent=5 // pred_region
        // Predicated region
        $region17: #{tpu_custom_call.1} parent=15 // pred_check
          %p95 = pneg %p44
        $region18: #{tpu_custom_call.1} parent=15 // pred_check_branch
          %97 = sbr.rel (%p95) target = $region20
        $region19: #{tpu_custom_call.1} parent=15 // pred_region
          %s98 = smul.u32 2, %s18
          %p99 = scmp.lt.s32.totalorder %s17, 1
          %s100 = scalar_select %p99, %s17, 1
          %p101 = scmp.lt.s32.totalorder %s98, 1
          %s102 = scalar_select %p101, %s98, 1
          %s103 = smul.addr %s100, 2
          %s104 = sadd.s32 %s102, %s103
          %s105 = smul.addr %s104, 4
          %s106 = scalar_lea.vmem %s0, %s105
          %s107 = smul.u32 2, %s18
        $region20: #{tpu_custom_call.1} parent=15 // pred_fallthru
          _
      $region16: #{tpu_custom_call.1} parent=5 // pred_fallthru
        _
      %p108 = scmp.le.s32.totalorder 1, %s10
      %p109 = scmp.lt.s32.totalorder %s10, 3
      %p110 = pnand %p108, %p109
      %p111 = pneg %p110
      // Predicated region
      $region21: #{tpu_custom_call.1} parent=5 // pred_check
        _
      $region22: #{tpu_custom_call.1} parent=5 // pred_check_branch
        %113 = sbr.rel (%p110) target = $region24
      $region23: #{tpu_custom_call.1} parent=5 // pred_region
        %s114 = ssub.s32 %s10, 1
        %s115 = smul.u32 2, %s20
        %p116 = scmp.lt.s32.totalorder %s19, 1
        %s117 = scalar_select %p116, %s19, 1
        %p118 = scmp.lt.s32.totalorder %s115, 1
        %s119 = scalar_select %p118, %s115, 1
        %s120 = smul.addr %s117, 2
        %s121 = sadd.s32 %s119, %s120
        %s122 = smul.addr %s121, 4
        %s123 = scalar_lea.vmem %s0, %s122
        %p124 = pneg %p50
        %p125 = pneg %p47
        %p126 = pneg %p76
        %p127 = pneg %p73
        %s128 = sand.u32 %s63, 1
        %s129 = scalar_lea.sflag [#allocation4], %s128
        %s130 = sand.u32 %s63, 1
        %s131 = smul.addr %s130, 8
        %s132 = scalar_lea.vmem [#allocation3], %s131
        %s133 = smul.u32 2, %s20
        %p134 = scmp.lt.s32.totalorder %s19, 1
        %s135 = scalar_select %p134, %s19, 1
        %p136 = scmp.lt.s32.totalorder %s133, 1
        %s137 = scalar_select %p136, %s133, 1
        %s138 = smul.addr %s135, 2
        %s139 = sadd.s32 %s137, %s138
        %s140 = smul.addr %s139, 4
        %s141 = scalar_lea.vmem %s0, %s140
        %s142 = smul.u32 2, %s20
        %p143 = scmp.eq.s32.totalorder %s20, 0
        // Predicated region
        $region25: #{tpu_custom_call.1} parent=23 // pred_check
          %p144 = pneg %p143
        $region26: #{tpu_custom_call.1} parent=23 // pred_check_branch
          %146 = sbr.rel (%p144) target = $region28
        $region27: #{tpu_custom_call.1} parent=23 // pred_region
          %s147 = scalar_lea.smem [#allocation2], 0
          %148 = sst [smem:[%s147]] 0.0
        $region28: #{tpu_custom_call.1} parent=23 // pred_fallthru
          _
        %v149 = vld [vmem:[%s141] sm:$0x77]
        %v150 = vmul.f32 %v149, 0.2989
        %v151 = vmul.f32 %v149, 0.587
        %v153 = vrot.slane %v151, 5
        %v154 = vrot.slane %v153, 4
        %v156 = vadd.f32 %v150, %v154
        %v157 = vmul.f32 %v149, 0.114
        %v159 = vrot.slane %v157, 6
        %v160 = vrot.slane %v159, 4
        %v162 = vadd.f32 %v156, %v160
        %s163 = sld [smem:[#allocation2]]
        %v165 = vlaneseq
        %v166 = vshrl.u32 %v165, 7
        %v167 = vsub.s32 0, %v166
        %v168 = vrot.slane %v162, %v167
        %v169 = vlaneseq
        %v170 = vshrl.u32 %v169, 7
        %v171 = vsub.s32 4, %v170
        %v172 = vrot.slane %v162, %v171
        %vm175 = vcmask 1040384
        %v176 = vsel %vm175, %v168, 0.0
        %v177 = vsel %vm175, %v172, 0.0
        %v178 = vadd.f32 %v176, %v177
        %179 = vadd.xlane.f32.xlu0 %v178
        %v180 = vpop.xlane.xlu0 %179
        %v181 = vrot.slane %v180, 4
        %v182 = vadd.f32 %v180, %v181
        %v183 = vrot.slane %v182, 2
        %v184 = vadd.f32 %v182, %v183
        %v185 = vrot.slane %v184, 1
        %v186 = vadd.f32 %v184, %v185
        %s187 = vtos %v186
        %s188 = sadd.f32 %s163, %s187
        %s189 = scalar_lea.smem [#allocation2], 0
        %190 = sst [smem:[%s189]] %s188
        // Predicated region
        $region29: #{tpu_custom_call.1} parent=23 // pred_check
          %p191 = pneg %p143
        $region30: #{tpu_custom_call.1} parent=23 // pred_check_branch
          %193 = sbr.rel (%p191) target = $region32
        $region31: #{tpu_custom_call.1} parent=23 // pred_region
          %s194 = sld [smem:[#allocation2]]
          %s195 = smul.f32 %s194, 0.00390625
          %v196 = vstv %s195
          %197 = vst [vmem:[%s132] sm:$0xff] %v196
        $region32: #{tpu_custom_call.1} parent=23 // pred_fallthru
          _
        %s198 = sand.u32 %s63, 1
        %s199 = scalar_lea.sflag [#allocation4], %s198
        %s200 = sand.u32 %s63, 1
        %s201 = smul.addr %s200, 8
        %s202 = scalar_lea.vmem [#allocation3], %s201
        // Predicated region
        $region33: #{tpu_custom_call.1} parent=23 // pred_check
          %p203 = pneg %p73
        $region34: #{tpu_custom_call.1} parent=23 // pred_check_branch
          %205 = sbr.rel (%p203) target = $region36
        $region35: #{tpu_custom_call.1} parent=23 // pred_region
          %s207 = ssub.s32 128, 128
          %208 = vsyncadd %s199, %s207
          %s209 = smul.addr %s19, 128
          %s210 = scalar_lea.hbm %s1, %s209
          %s212 = sshll.u32 %s202, 4
          %s213 = int_to_ptr.vmem [resolvable:$true] %s212
          %215 = dma.vmem_to_hbm [thread:$0]  %s213, 128, %s210, %s199
        $region36: #{tpu_custom_call.1} parent=23 // pred_fallthru
          _
      $region24: #{tpu_custom_call.1} parent=5 // pred_fallthru
        _
      %p216 = scmp.le.s32.totalorder 2, %s10
      // Predicated region
      $region37: #{tpu_custom_call.1} parent=5 // pred_check
        %p217 = pneg %p216
      $region38: #{tpu_custom_call.1} parent=5 // pred_check_branch
        %219 = sbr.rel (%p217) target = $region40
      $region39: #{tpu_custom_call.1} parent=5 // pred_region
        %s220 = ssub.s32 %s10, 2
        // Predicated region
        $region41: #{tpu_custom_call.1} parent=39 // pred_check
          %p221 = pneg %p79
        $region42: #{tpu_custom_call.1} parent=39 // pred_check_branch
          %223 = sbr.rel (%p221) target = $region44
        $region43: #{tpu_custom_call.1} parent=39 // pred_region
          %s224 = sand.u32 %s64, 1
          %s225 = scalar_lea.sflag [#allocation4], %s224
          %s226 = sand.u32 %s64, 1
          %s227 = smul.addr %s226, 8
          %s228 = scalar_lea.vmem [#allocation3], %s227
          %229 = dma.done %s225, 128
        $region44: #{tpu_custom_call.1} parent=39 // pred_fallthru
          _
      $region40: #{tpu_custom_call.1} parent=5 // pred_fallthru
        _
    $region6: #{tpu_custom_call.1} parent=1 // loop_footer
      %s14 = sadd.s32 1, %s10
    $region7: #{tpu_custom_call.1} parent=1 // loop_footer_branch
      %9 = sbr.rel target = $region3
    $region8: #{tpu_custom_call.1} parent=1 // loop_exit
      _
    %230 = vsyncpa [#allocation4], 1
    %s231 = scalar_lea.sflag [#allocation4], 1
    %232 = vsyncpa %s231, 1

</llo_original>
